<compile_context>
chip_gen: v5e
topology: v5e:2x2
jax: 0.10.0
libtpu: 0.0.40
codegen_flags: <defaults>
</compile_context>

<pallas_src>
import math

import jax
import jax.numpy as jnp
import numpy as np
from jax.experimental import pallas as pl
from jax.experimental.pallas import tpu as pltpu

_NEG_FILL = -1000000000.0  # exact masked_fill value from the PyTorch module


# --------------------------------------------------------------------------
# Kernels
# --------------------------------------------------------------------------
def _softmax_attend(q, k, v, out_ref, score_ref, mask=None):
    """Shared body: scaled-dot-product attention on a (G, L, *) tile."""
    d = q.shape[-1]
    scale = 1.0 / math.sqrt(d)

    # score = q @ k^T / sqrt(d)  -> (G, L, L).  Default precision: single-pass
    # bf16 MXU with f32 accumulation (Precision.HIGHEST dropped on purpose).
    s = jnp.einsum("gld,gmd->glm", q, k,
                   preferred_element_type=jnp.float32) * scale
    if mask is not None:
        s = jnp.where(mask == 0, jnp.float32(_NEG_FILL), s)

    # Numerically stable softmax over the last (lane) axis.  The normalization
    # uses the EUP approximate reciprocal instead of a full-precision divide.
    s_max = jnp.max(s, axis=-1, keepdims=True)
    e = jnp.exp(s - s_max)
    denom = jnp.sum(e, axis=-1, keepdims=True)
    p = e * pl.reciprocal(denom, approx=True)

    # Cast once; reuse for both the score store and the PV matmul LHS.
    p_lo = p.astype(score_ref.dtype)
    score_ref[...] = p_lo

    o = jnp.einsum("glm,gmd->gld", p_lo, v,
                   preferred_element_type=jnp.float32)
    out_ref[...] = o.astype(out_ref.dtype)


def _sdpa_kernel(q_ref, k_ref, v_ref, out_ref, score_ref):
    _softmax_attend(q_ref[...], k_ref[...], v_ref[...], out_ref, score_ref)


def _sdpa_masked_kernel(q_ref, k_ref, v_ref, m_ref, out_ref, score_ref):
    _softmax_attend(q_ref[...], k_ref[...], v_ref[...], out_ref, score_ref,
                    mask=m_ref[...])


# --------------------------------------------------------------------------
# Tiling / VMEM budgeting
# --------------------------------------------------------------------------
def _vmem_capacity_bytes():
    """Physical VMEM of the attached TPU; conservative 64 MiB fallback."""
    try:
        cap = int(pltpu.get_tpu_info().vmem_capacity_bytes)
        if cap > 0:
            return cap
    except Exception:
        pass
    return 64 * 1024 * 1024  # v7x-safe lower bound


def _step_bytes(g, l, d, in_item, out_item, mask_item, mask_shared):
    """Approximate per-grid-step VMEM bytes for a tile of g (b,h) slices."""
    # Double-buffered pipeline blocks: q, k, v inputs + out, score outputs.
    blocks = 2 * (3 * g * l * d * in_item
                  + g * l * d * out_item
                  + g * l * l * out_item)
    if mask_item:
        mg = 1 if mask_shared else g
        blocks += 2 * mg * l * l * mask_item
    # f32 in-kernel temporaries (s / e / p) + f32 output accumulator.
    temps = 3 * g * l * l * 4 + g * l * d * 4
    return blocks + temps


def _pick_bh_tile(bh, l, d, in_item, out_item, mask_item, mask_shared, budget):
    """Largest divisor of BH whose working set fits `budget` bytes.

    Among fitting divisors, prefer an even grid length (v7x has two
    TensorCores sharing the "parallel" axis) as long as that does not shrink
    the tile by more than 2x.
    """
    divisors = [g for g in range(1, bh + 1) if bh % g == 0]
    fitting = [g for g in divisors
               if _step_bytes(g, l, d, in_item, out_item,
                              mask_item, mask_shared) <= budget]
    if not fitting:
        return 1
    g_max = max(fitting)
    even = [g for g in fitting if (bh // g) % 2 == 0]
    if even:
        g_even = max(even)
        if 2 * g_even >= g_max:
            return g_even
    return g_max


# --------------------------------------------------------------------------
# Public wrapper
# --------------------------------------------------------------------------
def scale_dot_product_attention(q, k, v, mask=None):
    """Pallas implementation of ScaleDotProductAttention.forward.

    q, k, v: (B, H, L, D);  mask: broadcastable to (B, H, L, L) or None.
    Returns (out, score) with shapes (B, H, L, D) and (B, H, L, L).
    """
    B, H, L, D = q.shape
    BH = B * H

    qf = q.reshape(BH, L, D)
    kf = k.reshape(BH, L, D)
    vf = v.reshape(BH, L, D)

    out_dtype = q.dtype
    in_item = jnp.dtype(q.dtype).itemsize
    out_item = jnp.dtype(out_dtype).itemsize

    # ---- mask preparation: keep it small (int8) and un-broadcast if shared.
    mf = None
    mask_item = 0
    mask_shared = True
    if mask is not None:
        m4 = jnp.asarray(mask)
        while m4.ndim < 4:
            m4 = m4[None]
        mb, mh = int(m4.shape[0]), int(m4.shape[1])
        m4 = jnp.broadcast_to(m4, (mb, mh, L, L))
        mask_shared = (mb == 1 and mh == 1)
        if mask_shared:
            mf = (m4.reshape(1, L, L) != 0).astype(jnp.int8)
        else:
            mf = (jnp.broadcast_to(m4, (B, H, L, L))
                  .reshape(BH, L, L) != 0).astype(jnp.int8)
        mask_item = 1

    # ---- VMEM-budget-driven (batch*head) tile size + explicit vmem limit.
    vmem_cap = _vmem_capacity_bytes()
    budget = int(0.70 * vmem_cap)
    G = _pick_bh_tile(BH, L, D, in_item, out_item, mask_item, mask_shared,
                      budget)
    grid = (BH // G,)
    needed = _step_bytes(G, L, D, in_item, out_item, mask_item, mask_shared)
    vmem_limit = min(int(0.85 * vmem_cap),
                     max(int(1.5 * needed), 32 * 1024 * 1024))

    qkv_spec = pl.BlockSpec((G, L, D), lambda i: (i, 0, 0))
    score_spec = pl.BlockSpec((G, L, L), lambda i: (i, 0, 0))

    out_shape = (
        jax.ShapeDtypeStruct((BH, L, D), out_dtype),   # attention output
        jax.ShapeDtypeStruct((BH, L, L), out_dtype),   # score (softmax probs)
    )
    cparams = pltpu.CompilerParams(
        dimension_semantics=("parallel",),
        vmem_limit_bytes=vmem_limit,
    )

    if mask is None:
        out, score = pl.pallas_call(
            _sdpa_kernel,
            out_shape=out_shape,
            grid=grid,
            in_specs=[qkv_spec, qkv_spec, qkv_spec],
            out_specs=(qkv_spec, score_spec),
            compiler_params=cparams,
        )(qf, kf, vf)
    else:
        if mask_shared:
            # Same block every step -> Pallas keeps it resident, no re-DMA.
            mask_spec = pl.BlockSpec((1, L, L), lambda i: (0, 0, 0))
        else:
            mask_spec = pl.BlockSpec((G, L, L), lambda i: (i, 0, 0))
        out, score = pl.pallas_call(
            _sdpa_masked_kernel,
            out_shape=out_shape,
            grid=grid,
            in_specs=[qkv_spec, qkv_spec, qkv_spec, mask_spec],
            out_specs=(qkv_spec, score_spec),
            compiler_params=cparams,
        )(qf, kf, vf, mf)

    return out.reshape(B, H, L, D), score.reshape(B, H, L, L)


# --------------------------------------------------------------------------
# Pure-JAX reference (full f32) matching the PyTorch forward.
# --------------------------------------------------------------------------
def sdpa_reference(q, k, v, mask=None):
    d = q.shape[-1]
    s = jnp.einsum("bhld,bhmd->bhlm", q, k,
                   precision=jax.lax.Precision.HIGHEST) / math.sqrt(d)
    if mask is not None:
        s = jnp.where(mask == 0, _NEG_FILL, s)
    p = jax.nn.softmax(s, axis=-1)
    o = jnp.einsum("bhlm,bhmd->bhld", p, v,
                   precision=jax.lax.Precision.HIGHEST)
    return o, p


if __name__ == "__main__":
    B, H, L, D = 2, 4, 8, 32
    key = jax.random.PRNGKey(0)
    kq, kk, kv = jax.random.split(key, 3)
    q = jax.random.normal(kq, (B, H, L, D), jnp.float32)
    k = jax.random.normal(kk, (B, H, L, D), jnp.float32)
    v = jax.random.normal(kv, (B, H, L, D), jnp.float32)

    # Kernel uses bf16-native MXU passes (f32 accumulation), so compare
    # against the f32 reference with bf16-level tolerances.
    rtol, atol = 2e-2, 2e-2

    # --- path 1: mask=None (the module's default call signature) -----------
    out, score = scale_dot_product_attention(q, k, v)
    out, score = jax.block_until_ready((out, score))
    ref_out, ref_score = sdpa_reference(q, k, v)
    assert out.shape == (B, H, L, D) and score.shape == (B, H, L, L)
    np.testing.assert_allclose(np.asarray(out), np.asarray(ref_out),
                               rtol=rtol, atol=atol)
    np.testing.assert_allclose(np.asarray(score), np.asarray(ref_score),
                               rtol=rtol, atol=atol)

    # --- path 2: with a (broadcastable) causal mask -------------------------
    causal = jnp.tril(jnp.ones((L, L), jnp.float32))[None, None]  # (1,1,L,L)
    out_m, score_m = scale_dot_product_attention(q, k, v, mask=causal)
    out_m, score_m = jax.block_until_ready((out_m, score_m))
    ref_out_m, ref_score_m = sdpa_reference(
        q, k, v, jnp.broadcast_to(causal, (B, H, L, L)))
    np.testing.assert_allclose(np.asarray(out_m), np.asarray(ref_out_m),
                               rtol=rtol, atol=atol)
    np.testing.assert_allclose(np.asarray(score_m), np.asarray(ref_score_m),
                               rtol=rtol, atol=atol)

    # TODO(synk): the `e=1e-12` forward argument is unused in the PyTorch
    # module, so it is intentionally not modeled.
    print("KERNEL_OK")
</pallas_src>

<mosaic_0001>
module attributes {stable_mosaic.version = 11 : i64} {
  func.func @_sdpa_kernel(%arg0: i32, %arg1: memref<4x8x32xf32, #tpu.memory_space<vmem>>, %arg2: memref<4x8x32xf32, #tpu.memory_space<vmem>>, %arg3: memref<4x8x32xf32, #tpu.memory_space<vmem>>, %arg4: memref<4x8x32xf32, #tpu.memory_space<vmem>>, %arg5: memref<4x8x8xf32, #tpu.memory_space<vmem>>) attributes {dimension_semantics = [#tpu.dimension_semantics<parallel>], iteration_bounds = array<i64: 2>, scalar_prefetch = 0 : i64, scratch_operands = 0 : i64, tpu.core_type = #tpu.core_type<tc>, window_params = [{transform_indices = @transform_0, window_bounds = array<i64: 4, 8, 32>}, {transform_indices = @transform_1, window_bounds = array<i64: 4, 8, 32>}, {transform_indices = @transform_2, window_bounds = array<i64: 4, 8, 32>}, {transform_indices = @transform_3, window_bounds = array<i64: 4, 8, 32>}, {transform_indices = @transform_4, window_bounds = array<i64: 4, 8, 8>}]} {
    %c0 = arith.constant 0 : index
    %c0_0 = arith.constant 0 : index
    %c0_1 = arith.constant 0 : index
    %0 = vector.load %arg1[%c0, %c0_0, %c0_1] : memref<4x8x32xf32, #tpu.memory_space<vmem>>, vector<4x8x32xf32>
    %c0_2 = arith.constant 0 : index
    %c0_3 = arith.constant 0 : index
    %c0_4 = arith.constant 0 : index
    %1 = vector.load %arg2[%c0_2, %c0_3, %c0_4] : memref<4x8x32xf32, #tpu.memory_space<vmem>>, vector<4x8x32xf32>
    %c0_5 = arith.constant 0 : index
    %c0_6 = arith.constant 0 : index
    %c0_7 = arith.constant 0 : index
    %2 = vector.load %arg3[%c0_5, %c0_6, %c0_7] : memref<4x8x32xf32, #tpu.memory_space<vmem>>, vector<4x8x32xf32>
    "tpu.trace_start"() <{level = 10 : i32, message = "gld,gmd->glm"}> : () -> ()
    %cst = arith.constant dense<0.000000e+00> : vector<4x8x8xf32>
    %3 = tpu.matmul %0, %1, %cst {dimension_numbers = #tpu.dot_dimension_numbers<[2], [2], [1], [1], [0, 0, 0, 1, 1, 1], [0], [0]>} : vector<4x8x32xf32>, vector<4x8x32xf32>, vector<4x8x8xf32> -> vector<4x8x8xf32>
    "tpu.trace_stop"() : () -> ()
    %cst_8 = arith.constant 0.176776692 : f32
    %4 = vector.broadcast %cst_8 : f32 to vector<4x8x8xf32>
    %5 = arith.mulf %3, %4 : vector<4x8x8xf32>
    %cst_9 = arith.constant dense<0xFF800000> : vector<4x8xf32>
    %6 = vector.multi_reduction <maximumf>, %5, %cst_9 [2] : vector<4x8x8xf32> to vector<4x8xf32>
    %7 = vector.shape_cast %6 : vector<4x8xf32> to vector<4x8x1xf32>
    %8 = vector.broadcast %7 : vector<4x8x1xf32> to vector<4x8x8xf32>
    %9 = arith.subf %5, %8 : vector<4x8x8xf32>
    %10 = math.exp %9 : vector<4x8x8xf32>
    %cst_10 = arith.constant dense<0.000000e+00> : vector<4x8xf32>
    %11 = vector.multi_reduction <add>, %10, %cst_10 [2] : vector<4x8x8xf32> to vector<4x8xf32>
    %12 = vector.shape_cast %11 : vector<4x8xf32> to vector<4x8x1xf32>
    %13 = tpu.reciprocal %12 {approx = true} : vector<4x8x1xf32> -> vector<4x8x1xf32>
    %14 = vector.broadcast %13 : vector<4x8x1xf32> to vector<4x8x8xf32>
    %15 = arith.mulf %10, %14 : vector<4x8x8xf32>
    %c0_11 = arith.constant 0 : index
    %c0_12 = arith.constant 0 : index
    %c0_13 = arith.constant 0 : index
    %16 = vector.load %arg5[%c0_11, %c0_12, %c0_13] : memref<4x8x8xf32, #tpu.memory_space<vmem>>, vector<4x8x8xf32>
    tpu.vector_store %arg5[%c0_11, %c0_12, %c0_13], %15 {strides = array<i32>} : memref<4x8x8xf32, #tpu.memory_space<vmem>>, vector<4x8x8xf32>,
    "tpu.trace_start"() <{level = 10 : i32, message = "glm,gmd->gld"}> : () -> ()
    %cst_14 = arith.constant dense<0.000000e+00> : vector<4x8x32xf32>
    %17 = tpu.matmul %15, %2, %cst_14 {dimension_numbers = #tpu.dot_dimension_numbers<[2], [1], [1], [2], [0, 0, 0, 1, 1, 2], [0], [0]>} : vector<4x8x8xf32>, vector<4x8x32xf32>, vector<4x8x32xf32> -> vector<4x8x32xf32>
    "tpu.trace_stop"() : () -> ()
    %c0_15 = arith.constant 0 : index
    %c0_16 = arith.constant 0 : index
    %c0_17 = arith.constant 0 : index
    %18 = vector.load %arg4[%c0_15, %c0_16, %c0_17] : memref<4x8x32xf32, #tpu.memory_space<vmem>>, vector<4x8x32xf32>
    tpu.vector_store %arg4[%c0_15, %c0_16, %c0_17], %17 {strides = array<i32>} : memref<4x8x32xf32, #tpu.memory_space<vmem>>, vector<4x8x32xf32>,
    return
  }
  func.func @transform_0(%arg0: i32) -> (i32, i32, i32) {
    %c0_i32 = arith.constant 0 : i32
    %c0_i32_0 = arith.constant 0 : i32
    %c0_i32_1 = arith.constant 0 : i32
    return %arg0, %c0_i32, %c0_i32_0 : i32, i32, i32
  }
  func.func @transform_1(%arg0: i32) -> (i32, i32, i32) {
    %c0_i32 = arith.constant 0 : i32
    %c0_i32_0 = arith.constant 0 : i32
    %c0_i32_1 = arith.constant 0 : i32
    return %arg0, %c0_i32, %c0_i32_0 : i32, i32, i32
  }
  func.func @transform_2(%arg0: i32) -> (i32, i32, i32) {
    %c0_i32 = arith.constant 0 : i32
    %c0_i32_0 = arith.constant 0 : i32
    %c0_i32_1 = arith.constant 0 : i32
    return %arg0, %c0_i32, %c0_i32_0 : i32, i32, i32
  }
  func.func @transform_3(%arg0: i32) -> (i32, i32, i32) {
    %c0_i32 = arith.constant 0 : i32
    %c0_i32_0 = arith.constant 0 : i32
    %c0_i32_1 = arith.constant 0 : i32
    return %arg0, %c0_i32, %c0_i32_0 : i32, i32, i32
  }
  func.func @transform_4(%arg0: i32) -> (i32, i32, i32) {
    %c0_i32 = arith.constant 0 : i32
    %c0_i32_0 = arith.constant 0 : i32
    %c0_i32_1 = arith.constant 0 : i32
    return %arg0, %c0_i32, %c0_i32_0 : i32, i32, i32
  }
}

</mosaic_0001>

<llo_original>
// kernel: tpu_custom_call.1
$region0: #{tpu_custom_call.1}
  #allocation0 [shape = 'u32[]', space=smem, size = 0x4, offset = 0x4, fixed_abs, tag = 'smem constant byte address 0x4 - core index']
  #allocation1 [shape = 'u32[72,128]{1,0:T(1,128)}', space=vmem, size = 0x9000, scoped, tag = 'internal scratch']
  %s0 = inlined_call_operand.hbm [shape: f32[8,8,32], index: 0, kind: input, shape index: {}]
  %s1 = inlined_call_operand.hbm [shape: f32[8,8,32], index: 1, kind: input, shape index: {}]
  %s2 = inlined_call_operand.hbm [shape: f32[8,8,32], index: 2, kind: input, shape index: {}]
  %s3 = inlined_call_operand.hbm [shape: f32[8,8,32], index: 3, kind: output, shape index: {0}]
  %s4 = inlined_call_operand.hbm [shape: f32[8,8,8], index: 4, kind: output, shape index: {1}]
  %5 = xla_tuple %s3, %s4
  %s6 = sld [smem:[#allocation0]]
  $region65: #{tpu_custom_call.1} parent=0
    _
  %s8 = ssub.s32 1, %s6
  %s9 = scalar_select 0, %s8, %s6
  $region1: #{tpu_custom_call.1} parent=0
    #allocation2 [shape = 'u8[32768]{0}', space=vmem, size = 0x8000, scoped, tag = 'input window, operand 0']
    #allocation3 [shape = 's32[2]{0}', space=sflag, size = 0x8, scoped, tag = 'scoped memory for tpu_custom_call.1']
    #allocation4 [shape = 's32[2]{0}', space=sflag, size = 0x8, scoped, tag = 'scoped memory for tpu_custom_call.1']
    #allocation5 [shape = 'u8[32768]{0}', space=vmem, size = 0x8000, scoped, tag = 'input window, operand 1']
    #allocation6 [shape = 's32[2]{0}', space=sflag, size = 0x8, scoped, tag = 'scoped memory for tpu_custom_call.1']
    #allocation7 [shape = 'u8[32768]{0}', space=vmem, size = 0x8000, scoped, tag = 'input window, operand 2']
    #allocation8 [shape = 'u8[32768]{0}', space=vmem, size = 0x8000, scoped, tag = 'output window, operand 0']
    #allocation9 [shape = 'u8[32768]{0}', space=vmem, size = 0x8000, scoped, tag = 'output window, operand 1']
    #allocation10 [shape = 's32[2]{0}', space=sflag, size = 0x8, scoped, tag = 'scoped memory for tpu_custom_call.1']
    %10 = vsyncpa [#allocation3], 0
    %s11 = scalar_lea.sflag [#allocation3], 1
    %12 = vsyncpa %s11, 0
    %13 = vsyncpa [#allocation6], 0
    %s14 = scalar_lea.sflag [#allocation6], 1
    %15 = vsyncpa %s14, 0
    %16 = vsyncpa [#allocation4], 0
    %s17 = scalar_lea.sflag [#allocation4], 1
    %18 = vsyncpa %s17, 0
    %19 = vsyncpa [#allocation10], 0
    %s20 = scalar_lea.sflag [#allocation10], 1
    %21 = vsyncpa %s20, 0
    loop: start=0, step=1, limit=4
    $region2: #{tpu_custom_call.1} parent=1 // loop_pre_header
      _
    $region3: #{tpu_custom_call.1} parent=1 // loop_header
      %s23 = sphi 0, %s27
      %p24 = scmp.ge.s32.totalorder %s23, 4
      %s33 = sphi 0, %s35
      %s36 = sphi 0, %s33
      %s37 = sphi 0, %s36
      %s53 = sphi 0, %s37
      %s59 = sphi 0, %s61
      %s62 = sphi 0, %s59
      %s63 = sphi 0, %s62
      %s79 = sphi 0, %s63
      %s85 = sphi 0, %s87
      %s88 = sphi 0, %s85
      %s89 = sphi 0, %s88
      %s105 = sphi 0, %s89
      %s111 = sphi 0, %s113
      %s114 = sphi 0, %s111
      %s115 = sphi 0, %s114
      %s131 = sphi 0, %s115
      %s137 = sphi 0, %s139
      %s140 = sphi 0, %s137
      %s141 = sphi 0, %s140
      %s157 = sphi 0, %s141
    $region4: #{tpu_custom_call.1} parent=1 // loop_header_branch
      %26 = sbr.rel (%p24) target = $region8
    $region5: #{tpu_custom_call.1} parent=1 // loop_body
      %s28 = ssub.s32 %s23, 1
      %s29 = ssub.s32 %s23, 2
      %s30 = sadd.s32 %s23, 1
      %s31 = ssub.s32 %s23, %s30
      %p32 = scmp.eq.s32.totalorder %s31, 0
      %s34 = sadd.s32 %s33, 1
      %s35 = scalar_select %p32, %s33, %s34
      %p38 = pneg %p32
      %p39 = scmp.eq.s32.totalorder %s23, 1
      %p40 = por %p38, %p39
      %p41 = scmp.ne.s32.totalorder %s33, %s36
      %p42 = scmp.eq.s32.totalorder %s23, 0
      %p43 = por %p41, %p42
      %p44 = scmp.ne.s32.totalorder %s33, %s36
      %p45 = scmp.eq.s32.totalorder %s28, 1
      %p46 = por %p44, %p45
      %p47 = scmp.ne.s32.totalorder %s36, %s37
      %p48 = scmp.eq.s32.totalorder %s28, 0
      %p49 = por %p47, %p48
      %p50 = scmp.ne.s32.totalorder %s36, %s37
      %p51 = scmp.eq.s32.totalorder %s29, 1
      %p52 = por %p50, %p51
      %p54 = scmp.ne.s32.totalorder %s37, %s53
      %p55 = scmp.eq.s32.totalorder %s29, 0
      %p56 = por %p54, %p55
      %s57 = ssub.s32 %s23, %s30
      %p58 = scmp.eq.s32.totalorder %s57, 0
      %s60 = sadd.s32 %s59, 1
      %s61 = scalar_select %p58, %s59, %s60
      %p64 = pneg %p58
      %p65 = scmp.eq.s32.totalorder %s23, 1
      %p66 = por %p64, %p65
      %p67 = scmp.ne.s32.totalorder %s59, %s62
      %p68 = scmp.eq.s32.totalorder %s23, 0
      %p69 = por %p67, %p68
      %p70 = scmp.ne.s32.totalorder %s59, %s62
      %p71 = scmp.eq.s32.totalorder %s28, 1
      %p72 = por %p70, %p71
      %p73 = scmp.ne.s32.totalorder %s62, %s63
      %p74 = scmp.eq.s32.totalorder %s28, 0
      %p75 = por %p73, %p74
      %p76 = scmp.ne.s32.totalorder %s62, %s63
      %p77 = scmp.eq.s32.totalorder %s29, 1
      %p78 = por %p76, %p77
      %p80 = scmp.ne.s32.totalorder %s63, %s79
      %p81 = scmp.eq.s32.totalorder %s29, 0
      %p82 = por %p80, %p81
      %s83 = ssub.s32 %s23, %s30
      %p84 = scmp.eq.s32.totalorder %s83, 0
      %s86 = sadd.s32 %s85, 1
      %s87 = scalar_select %p84, %s85, %s86
      %p90 = pneg %p84
      %p91 = scmp.eq.s32.totalorder %s23, 1
      %p92 = por %p90, %p91
      %p93 = scmp.ne.s32.totalorder %s85, %s88
      %p94 = scmp.eq.s32.totalorder %s23, 0
      %p95 = por %p93, %p94
      %p96 = scmp.ne.s32.totalorder %s85, %s88
      %p97 = scmp.eq.s32.totalorder %s28, 1
      %p98 = por %p96, %p97
      %p99 = scmp.ne.s32.totalorder %s88, %s89
      %p100 = scmp.eq.s32.totalorder %s28, 0
      %p101 = por %p99, %p100
      %p102 = scmp.ne.s32.totalorder %s88, %s89
      %p103 = scmp.eq.s32.totalorder %s29, 1
      %p104 = por %p102, %p103
      %p106 = scmp.ne.s32.totalorder %s89, %s105
      %p107 = scmp.eq.s32.totalorder %s29, 0
      %p108 = por %p106, %p107
      %s109 = ssub.s32 %s23, %s30
      %p110 = scmp.eq.s32.totalorder %s109, 0
      %s112 = sadd.s32 %s111, 1
      %s113 = scalar_select %p110, %s111, %s112
      %p116 = pneg %p110
      %p117 = scmp.eq.s32.totalorder %s23, 1
      %p118 = por %p116, %p117
      %p119 = scmp.ne.s32.totalorder %s111, %s114
      %p120 = scmp.eq.s32.totalorder %s23, 0
      %p121 = por %p119, %p120
      %p122 = scmp.ne.s32.totalorder %s111, %s114
      %p123 = scmp.eq.s32.totalorder %s28, 1
      %p124 = por %p122, %p123
      %p125 = scmp.ne.s32.totalorder %s114, %s115
      %p126 = scmp.eq.s32.totalorder %s28, 0
      %p127 = por %p125, %p126
      %p128 = scmp.ne.s32.totalorder %s114, %s115
      %p129 = scmp.eq.s32.totalorder %s29, 1
      %p130 = por %p128, %p129
      %p132 = scmp.ne.s32.totalorder %s115, %s131
      %p133 = scmp.eq.s32.totalorder %s29, 0
      %p134 = por %p132, %p133
      %s135 = ssub.s32 %s23, %s30
      %p136 = scmp.eq.s32.totalorder %s135, 0
      %s138 = sadd.s32 %s137, 1
      %s139 = scalar_select %p136, %s137, %s138
      %p142 = pneg %p136
      %p143 = scmp.eq.s32.totalorder %s23, 1
      %p144 = por %p142, %p143
      %p145 = scmp.ne.s32.totalorder %s137, %s140
      %p146 = scmp.eq.s32.totalorder %s23, 0
      %p147 = por %p145, %p146
      %p148 = scmp.ne.s32.totalorder %s137, %s140
      %p149 = scmp.eq.s32.totalorder %s28, 1
      %p150 = por %p148, %p149
      %p151 = scmp.ne.s32.totalorder %s140, %s141
      %p152 = scmp.eq.s32.totalorder %s28, 0
      %p153 = por %p151, %p152
      %p154 = scmp.ne.s32.totalorder %s140, %s141
      %p155 = scmp.eq.s32.totalorder %s29, 1
      %p156 = por %p154, %p155
      %p158 = scmp.ne.s32.totalorder %s141, %s157
      %p159 = scmp.eq.s32.totalorder %s29, 0
      %p160 = por %p158, %p159
      %p161 = scmp.le.s32.totalorder 1, %s23
      %p162 = scmp.lt.s32.totalorder %s23, 3
      %p163 = pnand %p161, %p162
      %p164 = pneg %p163
      // Predicated region
      $region9: #{tpu_custom_call.1} parent=5 // pred_check
        _
      $region10: #{tpu_custom_call.1} parent=5 // pred_check_branch
        %166 = sbr.rel (%p163) target = $region12
      $region11: #{tpu_custom_call.1} parent=5 // pred_region
        %s167 = ssub.s32 %s23, 1
      $region12: #{tpu_custom_call.1} parent=5 // pred_fallthru
        _
      %p168 = scmp.lt.s32.totalorder %s23, 2
      // Predicated region
      $region13: #{tpu_custom_call.1} parent=5 // pred_check
        %p169 = pneg %p168
      $region14: #{tpu_custom_call.1} parent=5 // pred_check_branch
        %171 = sbr.rel (%p169) target = $region16
      $region15: #{tpu_custom_call.1} parent=5 // pred_region
        // Predicated region
        $region17: #{tpu_custom_call.1} parent=15 // pred_check
          %p172 = pneg %p43
        $region18: #{tpu_custom_call.1} parent=15 // pred_check_branch
          %174 = sbr.rel (%p172) target = $region20
        $region19: #{tpu_custom_call.1} parent=15 // pred_region
          %s175 = sand.u32 %s33, 1
          %s176 = scalar_lea.sflag [#allocation3], %s175
          %s177 = sand.u32 %s33, 1
          %s178 = smul.addr %s177, 32
          %s179 = scalar_lea.vmem [#allocation2], %s178
          %s180 = smul.u32 4, %s23
          %182 = vsyncadd %s176, 0
          %s183 = smul.addr %s180, 8
          %s184 = scalar_lea.hbm %s0, %s183
          %s185 = sshll.u32 %s184, 4
          %s186 = int_to_ptr.hbm [resolvable:$true] %s185
          %s187 = sshll.u32 %s179, 4
          %s188 = int_to_ptr.vmem [resolvable:$true] %s187
          %193 = dma.hbm_to_vmem [thread:$0]  %s186, 512, %s188, %s176, 128, 128, 8
        $region20: #{tpu_custom_call.1} parent=15 // pred_fallthru
          _
        // Predicated region
        $region21: #{tpu_custom_call.1} parent=15 // pred_check
          %p194 = pneg %p69
        $region22: #{tpu_custom_call.1} parent=15 // pred_check_branch
          %196 = sbr.rel (%p194) target = $region24
        $region23: #{tpu_custom_call.1} parent=15 // pred_region
          %s197 = sand.u32 %s23, 1
          %s198 = scalar_lea.sflag [#allocation6], %s197
          %s199 = sand.u32 %s59, 1
          %s200 = smul.addr %s199, 32
          %s201 = scalar_lea.vmem [#allocation5], %s200
          %s202 = smul.u32 4, %s23
          %204 = vsyncadd %s198, 0
          %s205 = smul.addr %s202, 8
          %s206 = scalar_lea.hbm %s1, %s205
          %s207 = sshll.u32 %s206, 4
          %s208 = int_to_ptr.hbm [resolvable:$true] %s207
          %s209 = sshll.u32 %s201, 4
          %s210 = int_to_ptr.vmem [resolvable:$true] %s209
          %215 = dma.hbm_to_vmem [thread:$0]  %s208, 512, %s210, %s198, 128, 128, 8
        $region24: #{tpu_custom_call.1} parent=15 // pred_fallthru
          _
        // Predicated region
        $region25: #{tpu_custom_call.1} parent=15 // pred_check
          %p216 = pneg %p95
        $region26: #{tpu_custom_call.1} parent=15 // pred_check_branch
          %218 = sbr.rel (%p216) target = $region28
        $region27: #{tpu_custom_call.1} parent=15 // pred_region
          %s219 = sand.u32 %s23, 1
          %s220 = scalar_lea.sflag [#allocation6], %s219
          %s221 = sand.u32 %s85, 1
          %s222 = smul.addr %s221, 32
          %s223 = scalar_lea.vmem [#allocation7], %s222
          %s224 = smul.u32 4, %s23
          %226 = vsyncadd %s220, 0
          %s227 = smul.addr %s224, 8
          %s228 = scalar_lea.hbm %s2, %s227
          %s229 = sshll.u32 %s228, 4
          %s230 = int_to_ptr.hbm [resolvable:$true] %s229
          %s231 = sshll.u32 %s223, 4
          %s232 = int_to_ptr.vmem [resolvable:$true] %s231
          %237 = dma.hbm_to_vmem [thread:$0]  %s230, 512, %s232, %s220, 128, 128, 8
        $region28: #{tpu_custom_call.1} parent=15 // pred_fallthru
          _
      $region16: #{tpu_custom_call.1} parent=5 // pred_fallthru
        _
      %p238 = scmp.le.s32.totalorder 1, %s23
      %p239 = scmp.lt.s32.totalorder %s23, 3
      %p240 = pnand %p238, %p239
      %p241 = pneg %p240
      // Predicated region
      $region29: #{tpu_custom_call.1} parent=5 // pred_check
        _
      $region30: #{tpu_custom_call.1} parent=5 // pred_check_branch
        %243 = sbr.rel (%p240) target = $region32
      $region31: #{tpu_custom_call.1} parent=5 // pred_region
        %s244 = ssub.s32 %s23, 1
        %s245 = sand.u32 %s36, 1
        %s246 = scalar_lea.sflag [#allocation3], %s245
        %s247 = sand.u32 %s36, 1
        %s248 = smul.addr %s247, 32
        %s249 = scalar_lea.vmem [#allocation2], %s248
        // Predicated region
        $region33: #{tpu_custom_call.1} parent=31 // pred_check
          %p250 = pneg %p49
        $region34: #{tpu_custom_call.1} parent=31 // pred_check_branch
          %252 = sbr.rel (%p250) target = $region36
        $region35: #{tpu_custom_call.1} parent=31 // pred_region
          %254 = dma.done %s246, 512
        $region36: #{tpu_custom_call.1} parent=31 // pred_fallthru
          _
        %s255 = sand.u32 %s28, 1
        %s256 = scalar_lea.sflag [#allocation6], %s255
        %s257 = sand.u32 %s62, 1
        %s258 = smul.addr %s257, 32
        %s259 = scalar_lea.vmem [#allocation5], %s258
        // Predicated region
        $region37: #{tpu_custom_call.1} parent=31 // pred_check
          %p260 = pneg %p75
        $region38: #{tpu_custom_call.1} parent=31 // pred_check_branch
          %262 = sbr.rel (%p260) target = $region40
        $region39: #{tpu_custom_call.1} parent=31 // pred_region
          %264 = dma.done %s256, 512
        $region40: #{tpu_custom_call.1} parent=31 // pred_fallthru
          _
        %s265 = sand.u32 %s28, 1
        %s266 = scalar_lea.sflag [#allocation6], %s265
        %s267 = sand.u32 %s88, 1
        %s268 = smul.addr %s267, 32
        %s269 = scalar_lea.vmem [#allocation7], %s268
        // Predicated region
        $region41: #{tpu_custom_call.1} parent=31 // pred_check
          %p270 = pneg %p101
        $region42: #{tpu_custom_call.1} parent=31 // pred_check_branch
          %272 = sbr.rel (%p270) target = $region44
        $region43: #{tpu_custom_call.1} parent=31 // pred_region
          %274 = dma.done %s266, 512
        $region44: #{tpu_custom_call.1} parent=31 // pred_fallthru
          _
        %s275 = sand.u32 %s36, 1
        %s276 = scalar_lea.sflag [#allocation3], %s275
        %s277 = sand.u32 %s36, 1
        %s278 = smul.addr %s277, 32
        %s279 = scalar_lea.vmem [#allocation2], %s278
        %p280 = pneg %p49
        %p281 = pneg %p46
        %s282 = sand.u32 %s28, 1
        %s283 = scalar_lea.sflag [#allocation6], %s282
        %s284 = sand.u32 %s62, 1
        %s285 = smul.addr %s284, 32
        %s286 = scalar_lea.vmem [#allocation5], %s285
        %p287 = pneg %p75
        %p288 = pneg %p72
        %s289 = sand.u32 %s28, 1
        %s290 = scalar_lea.sflag [#allocation6], %s289
        %s291 = sand.u32 %s88, 1
        %s292 = smul.addr %s291, 32
        %s293 = scalar_lea.vmem [#allocation7], %s292
        %p294 = pneg %p101
        %p295 = pneg %p98
        %p296 = pneg %p127
        %p297 = pneg %p124
        %s298 = sand.u32 %s114, 1
        %s299 = scalar_lea.sflag [#allocation4], %s298
        %s300 = sand.u32 %s114, 1
        %s301 = smul.addr %s300, 32
        %s302 = scalar_lea.vmem [#allocation8], %s301
        %p303 = pneg %p153
        %p304 = pneg %p150
        %s305 = sand.u32 %s140, 1
        %s306 = scalar_lea.sflag [#allocation10], %s305
        %s307 = sand.u32 %s140, 1
        %s308 = smul.addr %s307, 32
        %s309 = scalar_lea.vmem [#allocation9], %s308
        %s310 = smul.u32 4, %s28
        %s311 = smul.u32 4, %s28
        %s312 = smul.u32 4, %s28
        %s313 = smul.u32 4, %s28
        %s314 = smul.u32 4, %s28
        %v315 = vld [vmem:[%s249] sm:$0xff]
        %v316 = vld [vmem:[%s249 + $0x8] sm:$0xff]
        %v317 = vld [vmem:[%s249 + $0x10] sm:$0xff]
        %v318 = vld [vmem:[%s249 + $0x18] sm:$0xff]
        %v319 = vld [vmem:[%s259] sm:$0xff]
        %v320 = vld [vmem:[%s259 + $0x8] sm:$0xff]
        %v321 = vld [vmem:[%s259 + $0x10] sm:$0xff]
        %v322 = vld [vmem:[%s259 + $0x18] sm:$0xff]
        %v323 = vld [vmem:[%s269] sm:$0xff]
        %v324 = vld [vmem:[%s269 + $0x8] sm:$0xff]
        %v325 = vld [vmem:[%s269 + $0x10] sm:$0xff]
        %v326 = vld [vmem:[%s269 + $0x18] sm:$0xff]
        %vm327 = vcmask 261120
        %v329 = vsel %vm327, %v315, 0
        %v332 = vsel %vm327, %v319, 0
        %334 = vmatpush.xpose.msra.mxu0 0.0
        %335 = vmatpush.xpose.msra.mxu0 0.0
        %336 = vmatpush.xpose.msra.mxu0 0.0
        %337 = vmatpush.xpose.msra.mxu0 0.0
        %338 = vmatpush.xpose.msra.mxu0 0.0
        %339 = vmatpush.xpose.msra.mxu0 0.0
        %340 = vmatpush.xpose.msra.mxu0 0.0
        %341 = vmatpush.xpose.msra.mxu0 0.0
        %342 = vmatpush.xpose.msra.mxu0 0.0
        %343 = vmatpush.xpose.msra.mxu0 0.0
        %344 = vmatpush.xpose.msra.mxu0 0.0
        %345 = vmatpush.xpose.msra.mxu0 0.0
        %346 = vmatpush.xpose.msra.mxu0 0.0
        %347 = vmatpush.xpose.msra.mxu0 0.0
        %348 = vmatpush.xpose.msra.mxu0 0.0
        %349 = vmatpush.xpose.msra.mxu0 %v332
        %350 = vmatmul.f32.gmra.mxu0 %v329
        %v351 = vpop.f32.mrf.mxu0
        %v352 = vadd.f32 0.0, %v351
        %353 = vdwg.mxu0
        %v355 = vsel %vm327, %v316, 0
        %v358 = vsel %vm327, %v320, 0
        %360 = vmatpush.xpose.msra.mxu0 0.0
        %361 = vmatpush.xpose.msra.mxu0 0.0
        %362 = vmatpush.xpose.msra.mxu0 0.0
        %363 = vmatpush.xpose.msra.mxu0 0.0
        %364 = vmatpush.xpose.msra.mxu0 0.0
        %365 = vmatpush.xpose.msra.mxu0 0.0
        %366 = vmatpush.xpose.msra.mxu0 0.0
        %367 = vmatpush.xpose.msra.mxu0 0.0
        %368 = vmatpush.xpose.msra.mxu0 0.0
        %369 = vmatpush.xpose.msra.mxu0 0.0
        %370 = vmatpush.xpose.msra.mxu0 0.0
        %371 = vmatpush.xpose.msra.mxu0 0.0
        %372 = vmatpush.xpose.msra.mxu0 0.0
        %373 = vmatpush.xpose.msra.mxu0 0.0
        %374 = vmatpush.xpose.msra.mxu0 0.0
        %375 = vmatpush.xpose.msra.mxu0 %v358
        %376 = vmatmul.f32.gmra.mxu0 %v355
        %v377 = vpop.f32.mrf.mxu0
        %v378 = vadd.f32 0.0, %v377
        %379 = vdwg.mxu0
        %v381 = vsel %vm327, %v317, 0
        %v384 = vsel %vm327, %v321, 0
        %386 = vmatpush.xpose.msra.mxu0 0.0
        %387 = vmatpush.xpose.msra.mxu0 0.0
        %388 = vmatpush.xpose.msra.mxu0 0.0
        %389 = vmatpush.xpose.msra.mxu0 0.0
        %390 = vmatpush.xpose.msra.mxu0 0.0
        %391 = vmatpush.xpose.msra.mxu0 0.0
        %392 = vmatpush.xpose.msra.mxu0 0.0
        %393 = vmatpush.xpose.msra.mxu0 0.0
        %394 = vmatpush.xpose.msra.mxu0 0.0
        %395 = vmatpush.xpose.msra.mxu0 0.0
        %396 = vmatpush.xpose.msra.mxu0 0.0
        %397 = vmatpush.xpose.msra.mxu0 0.0
        %398 = vmatpush.xpose.msra.mxu0 0.0
        %399 = vmatpush.xpose.msra.mxu0 0.0
        %400 = vmatpush.xpose.msra.mxu0 0.0
        %401 = vmatpush.xpose.msra.mxu0 %v384
        %402 = vmatmul.f32.gmra.mxu0 %v381
        %v403 = vpop.f32.mrf.mxu0
        %v404 = vadd.f32 0.0, %v403
        %405 = vdwg.mxu0
        %v407 = vsel %vm327, %v318, 0
        %v410 = vsel %vm327, %v322, 0
        %412 = vmatpush.xpose.msra.mxu0 0.0
        %413 = vmatpush.xpose.msra.mxu0 0.0
        %414 = vmatpush.xpose.msra.mxu0 0.0
        %415 = vmatpush.xpose.msra.mxu0 0.0
        %416 = vmatpush.xpose.msra.mxu0 0.0
        %417 = vmatpush.xpose.msra.mxu0 0.0
        %418 = vmatpush.xpose.msra.mxu0 0.0
        %419 = vmatpush.xpose.msra.mxu0 0.0
        %420 = vmatpush.xpose.msra.mxu0 0.0
        %421 = vmatpush.xpose.msra.mxu0 0.0
        %422 = vmatpush.xpose.msra.mxu0 0.0
        %423 = vmatpush.xpose.msra.mxu0 0.0
        %424 = vmatpush.xpose.msra.mxu0 0.0
        %425 = vmatpush.xpose.msra.mxu0 0.0
        %426 = vmatpush.xpose.msra.mxu0 0.0
        %427 = vmatpush.xpose.msra.mxu0 %v410
        %428 = vmatmul.f32.gmra.mxu0 %v407
        %v429 = vpop.f32.mrf.mxu0
        %v430 = vadd.f32 0.0, %v429
        %431 = vdwg.mxu0
        %v432 = vmul.f32 %v352, 0.17677669
        %v433 = vmul.f32 %v378, 0.17677669
        %v434 = vmul.f32 %v404, 0.17677669
        %v435 = vmul.f32 %v430, 0.17677669
        %vm436 = vcmask 64512
        %v437 = vsel %vm436, %v432, -inf
        %438 = vmax.xlane.f32.xlu0 %v437
        %v439 = vpop.xlane.xlu0 %438
        %v440 = vsel %vm436, %v433, -inf
        %441 = vmax.xlane.f32.xlu0 %v440
        %v442 = vpop.xlane.xlu0 %441
        %v443 = vsel %vm436, %v434, -inf
        %444 = vmax.xlane.f32.xlu0 %v443
        %v445 = vpop.xlane.xlu0 %444
        %v446 = vsel %vm436, %v435, -inf
        %447 = vmax.xlane.f32.xlu0 %v446
        %v448 = vpop.xlane.xlu0 %447
        %v449 = vsub.f32 %v432, %v439
        %v450 = vsub.f32 %v433, %v442
        %v451 = vsub.f32 %v434, %v445
        %v452 = vsub.f32 %v435, %v448
        %v453 = vmul.f32 %v449, 1.442695
        %v454 = vpow.pop %v453
        %v455 = vmul.f32 %v450, 1.442695
        %v456 = vpow.pop %v455
        %v457 = vmul.f32 %v451, 1.442695
        %v458 = vpow.pop %v457
        %v459 = vmul.f32 %v452, 1.442695
        %v460 = vpow.pop %v459
        %v461 = vsel %vm436, %v454, 0.0
        %462 = vadd.xlane.f32.xlu0 %v461
        %v463 = vpop.xlane.xlu0 %462
        %v464 = vsel %vm436, %v456, 0.0
        %465 = vadd.xlane.f32.xlu0 %v464
        %v466 = vpop.xlane.xlu0 %465
        %v467 = vsel %vm436, %v458, 0.0
        %468 = vadd.xlane.f32.xlu0 %v467
        %v469 = vpop.xlane.xlu0 %468
        %v470 = vsel %vm436, %v460, 0.0
        %471 = vadd.xlane.f32.xlu0 %v470
        %v472 = vpop.xlane.xlu0 %471
        %v473 = vrcp.pop %v463
        %v474 = vrcp.pop %v466
        %v475 = vrcp.pop %v469
        %v476 = vrcp.pop %v472
        %v477 = vmul.f32 %v454, %v473
        %v478 = vmul.f32 %v456, %v474
        %v479 = vmul.f32 %v458, %v475
        %v480 = vmul.f32 %v460, %v476
        %481 = vst.msk [vmem:[%s309] sm:$0xff] %vm436, %v477
        %482 = vst.msk [vmem:[%s309 + $0x8] sm:$0xff] %vm436, %v478
        %483 = vst.msk [vmem:[%s309 + $0x10] sm:$0xff] %vm436, %v479
        %484 = vst.msk [vmem:[%s309 + $0x18] sm:$0xff] %vm436, %v480
        %v486 = vsel %vm436, %v477, 0
        %488 = vmatpush.msra.mxu0 0.0
        %489 = vmatpush.msra.mxu0 0.0
        %490 = vmatpush.msra.mxu0 0.0
        %491 = vmatpush.msra.mxu0 0.0
        %492 = vmatpush.msra.mxu0 0.0
        %493 = vmatpush.msra.mxu0 0.0
        %494 = vmatpush.msra.mxu0 0.0
        %495 = vmatpush.msra.mxu0 0.0
        %496 = vmatpush.msra.mxu0 0.0
        %497 = vmatpush.msra.mxu0 0.0
        %498 = vmatpush.msra.mxu0 0.0
        %499 = vmatpush.msra.mxu0 0.0
        %500 = vmatpush.msra.mxu0 0.0
        %501 = vmatpush.msra.mxu0 0.0
        %502 = vmatpush.msra.mxu0 0.0
        %503 = vmatpush.msra.mxu0 %v323
        %504 = vmatmul.f32.gmra.mxu0 %v486
        %v505 = vpop.f32.mrf.mxu0
        %v506 = vadd.f32 0.0, %v505
        %507 = vdwg.mxu0
        %v509 = vsel %vm436, %v478, 0
        %511 = vmatpush.msra.mxu0 0.0
        %512 = vmatpush.msra.mxu0 0.0
        %513 = vmatpush.msra.mxu0 0.0
        %514 = vmatpush.msra.mxu0 0.0
        %515 = vmatpush.msra.mxu0 0.0
        %516 = vmatpush.msra.mxu0 0.0
        %517 = vmatpush.msra.mxu0 0.0
        %518 = vmatpush.msra.mxu0 0.0
        %519 = vmatpush.msra.mxu0 0.0
        %520 = vmatpush.msra.mxu0 0.0
        %521 = vmatpush.msra.mxu0 0.0
        %522 = vmatpush.msra.mxu0 0.0
        %523 = vmatpush.msra.mxu0 0.0
        %524 = vmatpush.msra.mxu0 0.0
        %525 = vmatpush.msra.mxu0 0.0
        %526 = vmatpush.msra.mxu0 %v324
        %527 = vmatmul.f32.gmra.mxu0 %v509
        %v528 = vpop.f32.mrf.mxu0
        %v529 = vadd.f32 0.0, %v528
        %530 = vdwg.mxu0
        %v532 = vsel %vm436, %v479, 0
        %534 = vmatpush.msra.mxu0 0.0
        %535 = vmatpush.msra.mxu0 0.0
        %536 = vmatpush.msra.mxu0 0.0
        %537 = vmatpush.msra.mxu0 0.0
        %538 = vmatpush.msra.mxu0 0.0
        %539 = vmatpush.msra.mxu0 0.0
        %540 = vmatpush.msra.mxu0 0.0
        %541 = vmatpush.msra.mxu0 0.0
        %542 = vmatpush.msra.mxu0 0.0
        %543 = vmatpush.msra.mxu0 0.0
        %544 = vmatpush.msra.mxu0 0.0
        %545 = vmatpush.msra.mxu0 0.0
        %546 = vmatpush.msra.mxu0 0.0
        %547 = vmatpush.msra.mxu0 0.0
        %548 = vmatpush.msra.mxu0 0.0
        %549 = vmatpush.msra.mxu0 %v325
        %550 = vmatmul.f32.gmra.mxu0 %v532
        %v551 = vpop.f32.mrf.mxu0
        %v552 = vadd.f32 0.0, %v551
        %553 = vdwg.mxu0
        %v555 = vsel %vm436, %v480, 0
        %557 = vmatpush.msra.mxu0 0.0
        %558 = vmatpush.msra.mxu0 0.0
        %559 = vmatpush.msra.mxu0 0.0
        %560 = vmatpush.msra.mxu0 0.0
        %561 = vmatpush.msra.mxu0 0.0
        %562 = vmatpush.msra.mxu0 0.0
        %563 = vmatpush.msra.mxu0 0.0
        %564 = vmatpush.msra.mxu0 0.0
        %565 = vmatpush.msra.mxu0 0.0
        %566 = vmatpush.msra.mxu0 0.0
        %567 = vmatpush.msra.mxu0 0.0
        %568 = vmatpush.msra.mxu0 0.0
        %569 = vmatpush.msra.mxu0 0.0
        %570 = vmatpush.msra.mxu0 0.0
        %571 = vmatpush.msra.mxu0 0.0
        %572 = vmatpush.msra.mxu0 %v326
        %573 = vmatmul.f32.gmra.mxu0 %v555
        %v574 = vpop.f32.mrf.mxu0
        %v575 = vadd.f32 0.0, %v574
        %576 = vdwg.mxu0
        %577 = vst.msk [vmem:[%s302] sm:$0xff] %vm327, %v506
        %578 = vst.msk [vmem:[%s302 + $0x8] sm:$0xff] %vm327, %v529
        %579 = vst.msk [vmem:[%s302 + $0x10] sm:$0xff] %vm327, %v552
        %580 = vst.msk [vmem:[%s302 + $0x18] sm:$0xff] %vm327, %v575
        %s581 = sand.u32 %s114, 1
        %s582 = scalar_lea.sflag [#allocation4], %s581
        %s583 = sand.u32 %s114, 1
        %s584 = smul.addr %s583, 32
        %s585 = scalar_lea.vmem [#allocation8], %s584
        %s586 = sand.u32 %s140, 1
        %s587 = scalar_lea.sflag [#allocation10], %s586
        %s588 = sand.u32 %s140, 1
        %s589 = smul.addr %s588, 32
        %s590 = scalar_lea.vmem [#allocation9], %s589
        // Predicated region
        $region45: #{tpu_custom_call.1} parent=31 // pred_check
          %p591 = pneg %p124
        $region46: #{tpu_custom_call.1} parent=31 // pred_check_branch
          %593 = sbr.rel (%p591) target = $region48
        $region47: #{tpu_custom_call.1} parent=31 // pred_region
          %s594 = smul.u32 4, %s28
          %596 = vsyncadd %s582, 0
          %s597 = smul.addr %s594, 8
          %s598 = scalar_lea.hbm %s3, %s597
          %s599 = sshll.u32 %s585, 4
          %s600 = int_to_ptr.vmem [resolvable:$true] %s599
          %s601 = sshll.u32 %s598, 4
          %s602 = int_to_ptr.hbm [resolvable:$true] %s601
          %607 = dma.vmem_to_hbm [thread:$0]  %s600, 512, %s602, %s582, 128, 128, 8
        $region48: #{tpu_custom_call.1} parent=31 // pred_fallthru
          _
        // Predicated region
        $region49: #{tpu_custom_call.1} parent=31 // pred_check
          %p608 = pneg %p150
        $region50: #{tpu_custom_call.1} parent=31 // pred_check_branch
          %610 = sbr.rel (%p608) target = $region52
        $region51: #{tpu_custom_call.1} parent=31 // pred_region
          %s611 = smul.u32 4, %s28
          %613 = vsyncadd %s587, 0
          %s614 = smul.addr %s611, 8
          %s615 = scalar_lea.hbm %s4, %s614
          %s616 = sshll.u32 %s590, 4
          %s617 = int_to_ptr.vmem [resolvable:$true] %s616
          %s618 = sshll.u32 %s615, 4
          %s619 = int_to_ptr.hbm [resolvable:$true] %s618
          %624 = dma.vmem_to_hbm [thread:$0]  %s617, 512, %s619, %s587, 128, 128, 8
        $region52: #{tpu_custom_call.1} parent=31 // pred_fallthru
          _
      $region32: #{tpu_custom_call.1} parent=5 // pred_fallthru
        _
      %p625 = scmp.le.s32.totalorder 2, %s23
      // Predicated region
      $region53: #{tpu_custom_call.1} parent=5 // pred_check
        %p626 = pneg %p625
      $region54: #{tpu_custom_call.1} parent=5 // pred_check_branch
        %628 = sbr.rel (%p626) target = $region56
      $region55: #{tpu_custom_call.1} parent=5 // pred_region
        %s629 = ssub.s32 %s23, 2
        // Predicated region
        $region57: #{tpu_custom_call.1} parent=55 // pred_check
          %p630 = pneg %p130
        $region58: #{tpu_custom_call.1} parent=55 // pred_check_branch
          %632 = sbr.rel (%p630) target = $region60
        $region59: #{tpu_custom_call.1} parent=55 // pred_region
          %s633 = sand.u32 %s115, 1
          %s634 = scalar_lea.sflag [#allocation4], %s633
          %s635 = sand.u32 %s115, 1
          %s636 = smul.addr %s635, 32
          %s637 = scalar_lea.vmem [#allocation8], %s636
          %639 = dma.done %s634, 512
        $region60: #{tpu_custom_call.1} parent=55 // pred_fallthru
          _
        // Predicated region
        $region61: #{tpu_custom_call.1} parent=55 // pred_check
          %p640 = pneg %p156
        $region62: #{tpu_custom_call.1} parent=55 // pred_check_branch
          %642 = sbr.rel (%p640) target = $region64
        $region63: #{tpu_custom_call.1} parent=55 // pred_region
          %s643 = sand.u32 %s141, 1
          %s644 = scalar_lea.sflag [#allocation10], %s643
          %s645 = sand.u32 %s141, 1
          %s646 = smul.addr %s645, 32
          %s647 = scalar_lea.vmem [#allocation9], %s646
          %649 = dma.done %s644, 512
        $region64: #{tpu_custom_call.1} parent=55 // pred_fallthru
          _
      $region56: #{tpu_custom_call.1} parent=5 // pred_fallthru
        _
    $region6: #{tpu_custom_call.1} parent=1 // loop_footer
      %s27 = sadd.s32 1, %s23
    $region7: #{tpu_custom_call.1} parent=1 // loop_footer_branch
      %22 = sbr.rel target = $region3
    $region8: #{tpu_custom_call.1} parent=1 // loop_exit
      _
    %650 = vsyncpa [#allocation3], 1
    %s651 = scalar_lea.sflag [#allocation3], 1
    %652 = vsyncpa %s651, 1
    %653 = vsyncpa [#allocation6], 1
    %s654 = scalar_lea.sflag [#allocation6], 1
    %655 = vsyncpa %s654, 1
    %656 = vsyncpa [#allocation4], 1
    %s657 = scalar_lea.sflag [#allocation4], 1
    %658 = vsyncpa %s657, 1
    %659 = vsyncpa [#allocation10], 1
    %s660 = scalar_lea.sflag [#allocation10], 1
    %661 = vsyncpa %s660, 1

</llo_original>
